<compile_context>
chip_gen: v7x
topology: tpu7x:2x2x1
jax: 0.10.0
libtpu: 0.0.40
codegen_flags: <defaults>
</compile_context>

<pallas_src>
import functools

import jax
import jax.numpy as jnp
from jax.experimental import pallas as pl
from jax.experimental.pallas import tpu as pltpu

EPS = 1e-5


# ----------------------------- Pallas kernel --------------------------------

def _conv_block_kernel(x_ref, t1_ref, t2_ref,
                       g1_ref, b1_ref, g2_ref, b2_ref,
                       o_ref, *, n, h, w, c_out):
    """Fused Conv3x3 -> BN -> ReLU -> Conv3x3 -> BN -> ReLU.

    Layouts (all f32):
      x_ref  : (N*H, 3*W*Cin)   im2col'd input (3 H-taps concatenated on K)
      t1_ref : (3*W*Cin,  W*Cout)  banded (Toeplitz) conv1 weights
      t2_ref : (3*W*Cout, W*Cout)  banded (Toeplitz) conv2 weights
      g*/b*  : (1, W*Cout)      BN gamma / beta pre-tiled to lane width
      o_ref  : (N*H, W*Cout)    lane-dense output (last dim = 128)
    """
    rows = n * h
    lane_w = w * c_out
    inv_cnt = 1.0 / float(n * h * w)

    def lane_channel_sum(s):
        # s: (1, lane_w).  Sum lanes sharing the same (lane % c_out) via a
        # lane-strided log-reduction on the XLU; result is per-channel and
        # lane-replicated across all W positions (requires W a power of two).
        shift = lane_w // 2
        while shift >= c_out:
            s = s + pltpu.roll(s, shift=shift, axis=1)
            shift //= 2
        return s

    def bn_relu(y, g_ref, b_ref):
        # Training-mode batch stats, biased variance (matches nn.BatchNorm2d
        # forward in training mode).  Two-pass diff-based variance for
        # numerical safety; every elementwise op stays lane-dense.
        s = jnp.sum(y, axis=0, keepdims=True)                       # sublane reduce
        mean = lane_channel_sum(s) * inv_cnt                        # (1, lane_w)
        diff = y - mean
        var = lane_channel_sum(
            jnp.sum(diff * diff, axis=0, keepdims=True)) * inv_cnt  # biased
        scale = g_ref[...] * jax.lax.rsqrt(var + EPS)               # (1, lane_w)
        return jnp.maximum(diff * scale + b_ref[...], 0.0)

    # ---- layer 1: im2col LHS already built host-side -> single big-K matmul
    y = bn_relu(
        jnp.dot(x_ref[...], t1_ref[...], preferred_element_type=jnp.float32),
        g1_ref, b1_ref)

    # ---- layer 2: build the 3 H-tap operands in registers (roll + boundary
    #      mask), concatenate on K, single big-K matmul.  No scratch, no
    #      zero-fill, no HBM round trip for the intermediate.
    row_ids = jax.lax.broadcasted_iota(jnp.int32, (rows, lane_w), 0)
    zero = jnp.zeros_like(y)
    y_up = jnp.where((row_ids % h) == 0, zero,
                     pltpu.roll(y, shift=1, axis=0))          # row r holds y[r-1]
    y_dn = jnp.where((row_ids % h) == (h - 1), zero,
                     pltpu.roll(y, shift=rows - 1, axis=0))   # row r holds y[r+1]
    lhs2 = jnp.concatenate([y_up, y, y_dn], axis=-1)          # (rows, 3*lane_w)
    z = jnp.dot(lhs2, t2_ref[...], preferred_element_type=jnp.float32)
    o_ref[...] = bn_relu(z, g2_ref, b2_ref)


# ------------------------------- wrappers ------------------------------------

def _banded_conv_weights(w_hwio, width):
    """Fold the 3 W-taps, the zero 'same' W-padding AND the 3 H-taps of a
    3x3 conv into one matrix:
      T[kh*(W*Cin) + p*Cin + ci, w*Cout + o] = w_hwio[kh, p - w + 1, ci, o]
    (zero where the W-tap falls outside the image)."""
    kh, kw, c_in, c_out = w_hwio.shape
    p = jnp.arange(width)[None, :, None]          # input W position
    q = jnp.arange(width)[None, None, :]          # output W position
    taps = jnp.arange(kw)[:, None, None]
    band = (p == q + taps - 1).astype(w_hwio.dtype)            # (kw, W, W)
    t = jnp.einsum("kpw,hkco->hpcwo", band, w_hwio)            # (kh,W,Cin,W,Cout)
    return t.reshape(kh * width * c_in, width * c_out)


def _im2col_rows(x_flat, n, h, k):
    """(N, H, K) -> (N*H, 3*K): concatenate the 3 H-shifted copies (zero
    'same' H-padding) on the K axis."""
    zrow = jnp.zeros((n, 1, k), x_flat.dtype)
    x_up = jnp.concatenate([zrow, x_flat[:, :-1]], axis=1)     # row h holds x[h-1]
    x_dn = jnp.concatenate([x_flat[:, 1:], zrow], axis=1)      # row h holds x[h+1]
    return jnp.concatenate([x_up, x_flat, x_dn], axis=-1).reshape(n * h, 3 * k)


def conv_block(x_nchw, params):
    n, c_in, h, w = x_nchw.shape
    c_out = params["w1"].shape[-1]
    assert (w & (w - 1)) == 0, "lane log-reduction assumes W is a power of two"
    # TODO(synk): non-power-of-two W would need a masked/strided lane reduction.

    # NCHW -> (N, H, W*Cin) (W and Cin flattened on lanes), then im2col the H taps.
    x_flat = jnp.transpose(x_nchw, (0, 2, 3, 1)).reshape(n, h, w * c_in)
    x_im2col = _im2col_rows(x_flat, n, h, w * c_in)            # (N*H, 3*W*Cin)

    t1 = _banded_conv_weights(params["w1"], w)                 # (3*W*Cin,  W*Cout)
    t2 = _banded_conv_weights(params["w2"], w)                 # (3*W*Cout, W*Cout)

    lane_w = w * c_out
    g1 = jnp.tile(params["g1"], w).reshape(1, lane_w)          # lane = w*Cout + c
    b1 = jnp.tile(params["b1"], w).reshape(1, lane_w)
    g2 = jnp.tile(params["g2"], w).reshape(1, lane_w)
    b2 = jnp.tile(params["b2"], w).reshape(1, lane_w)

    kernel = functools.partial(_conv_block_kernel, n=n, h=h, w=w, c_out=c_out)
    vmem = pl.BlockSpec(memory_space=pltpu.MemorySpace.VMEM)

    out = pl.pallas_call(
        kernel,
        out_shape=jax.ShapeDtypeStruct((n * h, lane_w), jnp.float32),
        in_specs=[vmem] * 7,
        out_specs=vmem,
    )(x_im2col, t1, t2, g1, b1, g2, b2)

    # (N*H, W*Cout) -> NCHW
    return jnp.transpose(out.reshape(n, h, w, c_out), (0, 3, 1, 2))


# --------------------------- pure-JAX reference ------------------------------

def conv_block_ref(x_nchw, params):
    def conv(x, w_hwio):
        return jax.lax.conv_general_dilated(
            x, w_hwio, window_strides=(1, 1), padding="SAME",
            dimension_numbers=("NCHW", "HWIO", "NCHW"))

    def bn_relu_ref(x, g, b):
        mean = jnp.mean(x, axis=(0, 2, 3), keepdims=True)
        var = jnp.mean((x - mean) ** 2, axis=(0, 2, 3), keepdims=True)
        y = (x - mean) * jax.lax.rsqrt(var + EPS)
        y = y * g.reshape(1, -1, 1, 1) + b.reshape(1, -1, 1, 1)
        return jnp.maximum(y, 0.0)

    x = conv(x_nchw, params["w1"])
    x = bn_relu_ref(x, params["g1"], params["b1"])
    x = conv(x, params["w2"])
    x = bn_relu_ref(x, params["g2"], params["b2"])
    return x


# ---------------------------------- main -------------------------------------

if __name__ == "__main__":
    in_channels, out_channels = 4, 8
    N, H, W = 2, 16, 16

    key = jax.random.PRNGKey(0)
    kx, kw1, kw2 = jax.random.split(key, 3)

    x = jax.random.normal(kx, (N, in_channels, H, W), dtype=jnp.float32)

    # Conv weights generated in PyTorch OIHW layout, converted to HWIO.
    w1_oihw = 0.1 * jax.random.normal(kw1, (out_channels, in_channels, 3, 3),
                                      dtype=jnp.float32)
    w2_oihw = 0.1 * jax.random.normal(kw2, (out_channels, out_channels, 3, 3),
                                      dtype=jnp.float32)
    params = {
        "w1": jnp.transpose(w1_oihw, (2, 3, 1, 0)),   # HWIO
        "w2": jnp.transpose(w2_oihw, (2, 3, 1, 0)),   # HWIO
        # BatchNorm2d default init: weight=1, bias=0
        "g1": jnp.ones((out_channels,), jnp.float32),
        "b1": jnp.zeros((out_channels,), jnp.float32),
        "g2": jnp.ones((out_channels,), jnp.float32),
        "b2": jnp.zeros((out_channels,), jnp.float32),
    }

    out = jax.block_until_ready(conv_block(x, params))
    ref = jax.block_until_ready(conv_block_ref(x, params))

    assert out.shape == (N, out_channels, H, W), out.shape
    err = float(jnp.max(jnp.abs(out - ref)))
    assert jnp.allclose(out, ref, atol=1e-4, rtol=1e-4), err

    print("KERNEL_OK")
</pallas_src>

<mosaic_0001>
module attributes {stable_mosaic.version = 11 : i64} {
  func.func @_conv_block_kernel(%arg0: memref<32x192xf32, #tpu.memory_space<vmem>>, %arg1: memref<192x128xf32, #tpu.memory_space<vmem>>, %arg2: memref<384x128xf32, #tpu.memory_space<vmem>>, %arg3: memref<1x128xf32, #tpu.memory_space<vmem>>, %arg4: memref<1x128xf32, #tpu.memory_space<vmem>>, %arg5: memref<1x128xf32, #tpu.memory_space<vmem>>, %arg6: memref<1x128xf32, #tpu.memory_space<vmem>>, %arg7: memref<32x128xf32, #tpu.memory_space<vmem>>) attributes {dimension_semantics = [], scalar_prefetch = 0 : i64, scratch_operands = 0 : i64, tpu.core_type = #tpu.core_type<tc>} {
    %c0 = arith.constant 0 : index
    %c0_0 = arith.constant 0 : index
    %0 = vector.load %arg0[%c0, %c0_0] : memref<32x192xf32, #tpu.memory_space<vmem>>, vector<32x192xf32>
    %c0_1 = arith.constant 0 : index
    %c0_2 = arith.constant 0 : index
    %1 = vector.load %arg1[%c0_1, %c0_2] : memref<192x128xf32, #tpu.memory_space<vmem>>, vector<192x128xf32>
    %cst = arith.constant dense<0.000000e+00> : vector<32x128xf32>
    %2 = tpu.matmul %0, %1, %cst {dimension_numbers = #tpu.dot_dimension_numbers<[1], [0], [0], [1], [0, 0, 1, 1], [], []>} : vector<32x192xf32>, vector<192x128xf32>, vector<32x128xf32> -> vector<32x128xf32>
    %cst_3 = arith.constant dense<0.000000e+00> : vector<128xf32>
    %3 = vector.multi_reduction <add>, %2, %cst_3 [0] : vector<32x128xf32> to vector<128xf32>
    %4 = vector.shape_cast %3 : vector<128xf32> to vector<1x128xf32>
    %c64_i32 = arith.constant 64 : i32
    %5 = tpu.dynamic_rotate %4 by %c64_i32 dim 1 : vector<1x128xf32>, i32 -> vector<1x128xf32>
    %6 = arith.addf %4, %5 : vector<1x128xf32>
    %c32_i32 = arith.constant 32 : i32
    %7 = tpu.dynamic_rotate %6 by %c32_i32 dim 1 : vector<1x128xf32>, i32 -> vector<1x128xf32>
    %8 = arith.addf %6, %7 : vector<1x128xf32>
    %c16_i32 = arith.constant 16 : i32
    %9 = tpu.dynamic_rotate %8 by %c16_i32 dim 1 : vector<1x128xf32>, i32 -> vector<1x128xf32>
    %10 = arith.addf %8, %9 : vector<1x128xf32>
    %c8_i32 = arith.constant 8 : i32
    %11 = tpu.dynamic_rotate %10 by %c8_i32 dim 1 : vector<1x128xf32>, i32 -> vector<1x128xf32>
    %12 = arith.addf %10, %11 : vector<1x128xf32>
    %cst_4 = arith.constant 0.001953125 : f32
    %13 = vector.broadcast %cst_4 : f32 to vector<1x128xf32>
    %14 = arith.mulf %12, %13 : vector<1x128xf32>
    %15 = vector.broadcast %14 : vector<1x128xf32> to vector<32x128xf32>
    %16 = arith.subf %2, %15 : vector<32x128xf32>
    %17 = arith.mulf %16, %16 : vector<32x128xf32>
    %cst_5 = arith.constant dense<0.000000e+00> : vector<128xf32>
    %18 = vector.multi_reduction <add>, %17, %cst_5 [0] : vector<32x128xf32> to vector<128xf32>
    %19 = vector.shape_cast %18 : vector<128xf32> to vector<1x128xf32>
    %c64_i32_6 = arith.constant 64 : i32
    %20 = tpu.dynamic_rotate %19 by %c64_i32_6 dim 1 : vector<1x128xf32>, i32 -> vector<1x128xf32>
    %21 = arith.addf %19, %20 : vector<1x128xf32>
    %c32_i32_7 = arith.constant 32 : i32
    %22 = tpu.dynamic_rotate %21 by %c32_i32_7 dim 1 : vector<1x128xf32>, i32 -> vector<1x128xf32>
    %23 = arith.addf %21, %22 : vector<1x128xf32>
    %c16_i32_8 = arith.constant 16 : i32
    %24 = tpu.dynamic_rotate %23 by %c16_i32_8 dim 1 : vector<1x128xf32>, i32 -> vector<1x128xf32>
    %25 = arith.addf %23, %24 : vector<1x128xf32>
    %c8_i32_9 = arith.constant 8 : i32
    %26 = tpu.dynamic_rotate %25 by %c8_i32_9 dim 1 : vector<1x128xf32>, i32 -> vector<1x128xf32>
    %27 = arith.addf %25, %26 : vector<1x128xf32>
    %cst_10 = arith.constant 0.001953125 : f32
    %28 = vector.broadcast %cst_10 : f32 to vector<1x128xf32>
    %29 = arith.mulf %27, %28 : vector<1x128xf32>
    %c0_11 = arith.constant 0 : index
    %c0_12 = arith.constant 0 : index
    %30 = vector.load %arg3[%c0_11, %c0_12] : memref<1x128xf32, #tpu.memory_space<vmem>>, vector<1x128xf32>
    %cst_13 = arith.constant 9.99999974E-6 : f32
    %31 = vector.broadcast %cst_13 : f32 to vector<1x128xf32>
    %32 = arith.addf %29, %31 : vector<1x128xf32>
    %33 = math.rsqrt %32 : vector<1x128xf32>
    %34 = arith.mulf %30, %33 : vector<1x128xf32>
    %35 = vector.broadcast %34 : vector<1x128xf32> to vector<32x128xf32>
    %36 = arith.mulf %16, %35 : vector<32x128xf32>
    %c0_14 = arith.constant 0 : index
    %c0_15 = arith.constant 0 : index
    %37 = vector.load %arg4[%c0_14, %c0_15] : memref<1x128xf32, #tpu.memory_space<vmem>>, vector<1x128xf32>
    %38 = vector.broadcast %37 : vector<1x128xf32> to vector<32x128xf32>
    %39 = arith.addf %36, %38 : vector<32x128xf32>
    %cst_16 = arith.constant 0.000000e+00 : f32
    %40 = vector.broadcast %cst_16 : f32 to vector<32x128xf32>
    %41 = arith.maximumf %39, %40 : vector<32x128xf32>
    %42 = tpu.iota {dimensions = array<i32: 0>} : vector<32x128xi32>
    %cst_17 = arith.constant 0.000000e+00 : f32
    %43 = vector.broadcast %cst_17 : f32 to vector<32x128xf32>
    %c16_i32_18 = arith.constant 16 : i32
    %c0_i32 = arith.constant 0 : i32
    %44 = arith.cmpi eq, %c16_i32_18, %c0_i32 : i32
    %c1_i32 = arith.constant 1 : i32
    %45 = arith.select %44, %c1_i32, %c16_i32_18 : i32
    %46 = vector.broadcast %45 : i32 to vector<32x128xi32>
    %47 = arith.remsi %42, %46 : vector<32x128xi32>
    %c0_i32_19 = arith.constant 0 : i32
    %48 = vector.broadcast %c0_i32_19 : i32 to vector<32x128xi32>
    %49 = arith.cmpi ne, %47, %48 : vector<32x128xi32>
    %c0_i32_20 = arith.constant 0 : i32
    %50 = vector.broadcast %c0_i32_20 : i32 to vector<32x128xi32>
    %51 = arith.cmpi slt, %47, %50 : vector<32x128xi32>
    %c0_i32_21 = arith.constant 0 : i32
    %52 = arith.cmpi slt, %45, %c0_i32_21 : i32
    %53 = vector.broadcast %52 : i1 to vector<32x128xi1>
    %54 = vector.broadcast %53 : vector<32x128xi1> to vector<32x128xi1>
    %55 = arith.xori %51, %54 : vector<32x128xi1>
    %56 = arith.andi %55, %49 : vector<32x128xi1>
    %57 = vector.broadcast %45 : i32 to vector<32x128xi32>
    %58 = arith.addi %47, %57 : vector<32x128xi32>
    %59 = arith.select %56, %58, %47 : vector<32x128xi1>, vector<32x128xi32>
    %c0_i32_22 = arith.constant 0 : i32
    %60 = vector.broadcast %c0_i32_22 : i32 to vector<32x128xi32>
    %61 = arith.cmpi eq, %59, %60 : vector<32x128xi32>
    %c1_i32_23 = arith.constant 1 : i32
    %62 = tpu.dynamic_rotate %41 by %c1_i32_23 dim 0 : vector<32x128xf32>, i32 -> vector<32x128xf32>
    %63 = arith.select %61, %43, %62 : vector<32x128xi1>, vector<32x128xf32>
    %c16_i32_24 = arith.constant 16 : i32
    %c0_i32_25 = arith.constant 0 : i32
    %64 = arith.cmpi eq, %c16_i32_24, %c0_i32_25 : i32
    %c1_i32_26 = arith.constant 1 : i32
    %65 = arith.select %64, %c1_i32_26, %c16_i32_24 : i32
    %66 = vector.broadcast %65 : i32 to vector<32x128xi32>
    %67 = arith.remsi %42, %66 : vector<32x128xi32>
    %c0_i32_27 = arith.constant 0 : i32
    %68 = vector.broadcast %c0_i32_27 : i32 to vector<32x128xi32>
    %69 = arith.cmpi ne, %67, %68 : vector<32x128xi32>
    %c0_i32_28 = arith.constant 0 : i32
    %70 = vector.broadcast %c0_i32_28 : i32 to vector<32x128xi32>
    %71 = arith.cmpi slt, %67, %70 : vector<32x128xi32>
    %c0_i32_29 = arith.constant 0 : i32
    %72 = arith.cmpi slt, %65, %c0_i32_29 : i32
    %73 = vector.broadcast %72 : i1 to vector<32x128xi1>
    %74 = vector.broadcast %73 : vector<32x128xi1> to vector<32x128xi1>
    %75 = arith.xori %71, %74 : vector<32x128xi1>
    %76 = arith.andi %75, %69 : vector<32x128xi1>
    %77 = vector.broadcast %65 : i32 to vector<32x128xi32>
    %78 = arith.addi %67, %77 : vector<32x128xi32>
    %79 = arith.select %76, %78, %67 : vector<32x128xi1>, vector<32x128xi32>
    %c15_i32 = arith.constant 15 : i32
    %80 = vector.broadcast %c15_i32 : i32 to vector<32x128xi32>
    %81 = arith.cmpi eq, %79, %80 : vector<32x128xi32>
    %c31_i32 = arith.constant 31 : i32
    %82 = tpu.dynamic_rotate %41 by %c31_i32 dim 0 : vector<32x128xf32>, i32 -> vector<32x128xf32>
    %83 = arith.select %81, %43, %82 : vector<32x128xi1>, vector<32x128xf32>
    %84 = tpu.concatenate %63, %41, %83 in 1 : vector<32x128xf32>, vector<32x128xf32>, vector<32x128xf32> -> vector<32x384xf32>
    %c0_30 = arith.constant 0 : index
    %c0_31 = arith.constant 0 : index
    %85 = vector.load %arg2[%c0_30, %c0_31] : memref<384x128xf32, #tpu.memory_space<vmem>>, vector<384x128xf32>
    %cst_32 = arith.constant dense<0.000000e+00> : vector<32x128xf32>
    %86 = tpu.matmul %84, %85, %cst_32 {dimension_numbers = #tpu.dot_dimension_numbers<[1], [0], [0], [1], [0, 0, 1, 1], [], []>} : vector<32x384xf32>, vector<384x128xf32>, vector<32x128xf32> -> vector<32x128xf32>
    %cst_33 = arith.constant dense<0.000000e+00> : vector<128xf32>
    %87 = vector.multi_reduction <add>, %86, %cst_33 [0] : vector<32x128xf32> to vector<128xf32>
    %88 = vector.shape_cast %87 : vector<128xf32> to vector<1x128xf32>
    %c64_i32_34 = arith.constant 64 : i32
    %89 = tpu.dynamic_rotate %88 by %c64_i32_34 dim 1 : vector<1x128xf32>, i32 -> vector<1x128xf32>
    %90 = arith.addf %88, %89 : vector<1x128xf32>
    %c32_i32_35 = arith.constant 32 : i32
    %91 = tpu.dynamic_rotate %90 by %c32_i32_35 dim 1 : vector<1x128xf32>, i32 -> vector<1x128xf32>
    %92 = arith.addf %90, %91 : vector<1x128xf32>
    %c16_i32_36 = arith.constant 16 : i32
    %93 = tpu.dynamic_rotate %92 by %c16_i32_36 dim 1 : vector<1x128xf32>, i32 -> vector<1x128xf32>
    %94 = arith.addf %92, %93 : vector<1x128xf32>
    %c8_i32_37 = arith.constant 8 : i32
    %95 = tpu.dynamic_rotate %94 by %c8_i32_37 dim 1 : vector<1x128xf32>, i32 -> vector<1x128xf32>
    %96 = arith.addf %94, %95 : vector<1x128xf32>
    %cst_38 = arith.constant 0.001953125 : f32
    %97 = vector.broadcast %cst_38 : f32 to vector<1x128xf32>
    %98 = arith.mulf %96, %97 : vector<1x128xf32>
    %99 = vector.broadcast %98 : vector<1x128xf32> to vector<32x128xf32>
    %100 = arith.subf %86, %99 : vector<32x128xf32>
    %101 = arith.mulf %100, %100 : vector<32x128xf32>
    %cst_39 = arith.constant dense<0.000000e+00> : vector<128xf32>
    %102 = vector.multi_reduction <add>, %101, %cst_39 [0] : vector<32x128xf32> to vector<128xf32>
    %103 = vector.shape_cast %102 : vector<128xf32> to vector<1x128xf32>
    %c64_i32_40 = arith.constant 64 : i32
    %104 = tpu.dynamic_rotate %103 by %c64_i32_40 dim 1 : vector<1x128xf32>, i32 -> vector<1x128xf32>
    %105 = arith.addf %103, %104 : vector<1x128xf32>
    %c32_i32_41 = arith.constant 32 : i32
    %106 = tpu.dynamic_rotate %105 by %c32_i32_41 dim 1 : vector<1x128xf32>, i32 -> vector<1x128xf32>
    %107 = arith.addf %105, %106 : vector<1x128xf32>
    %c16_i32_42 = arith.constant 16 : i32
    %108 = tpu.dynamic_rotate %107 by %c16_i32_42 dim 1 : vector<1x128xf32>, i32 -> vector<1x128xf32>
    %109 = arith.addf %107, %108 : vector<1x128xf32>
    %c8_i32_43 = arith.constant 8 : i32
    %110 = tpu.dynamic_rotate %109 by %c8_i32_43 dim 1 : vector<1x128xf32>, i32 -> vector<1x128xf32>
    %111 = arith.addf %109, %110 : vector<1x128xf32>
    %cst_44 = arith.constant 0.001953125 : f32
    %112 = vector.broadcast %cst_44 : f32 to vector<1x128xf32>
    %113 = arith.mulf %111, %112 : vector<1x128xf32>
    %c0_45 = arith.constant 0 : index
    %c0_46 = arith.constant 0 : index
    %114 = vector.load %arg5[%c0_45, %c0_46] : memref<1x128xf32, #tpu.memory_space<vmem>>, vector<1x128xf32>
    %cst_47 = arith.constant 9.99999974E-6 : f32
    %115 = vector.broadcast %cst_47 : f32 to vector<1x128xf32>
    %116 = arith.addf %113, %115 : vector<1x128xf32>
    %117 = math.rsqrt %116 : vector<1x128xf32>
    %118 = arith.mulf %114, %117 : vector<1x128xf32>
    %119 = vector.broadcast %118 : vector<1x128xf32> to vector<32x128xf32>
    %120 = arith.mulf %100, %119 : vector<32x128xf32>
    %c0_48 = arith.constant 0 : index
    %c0_49 = arith.constant 0 : index
    %121 = vector.load %arg6[%c0_48, %c0_49] : memref<1x128xf32, #tpu.memory_space<vmem>>, vector<1x128xf32>
    %122 = vector.broadcast %121 : vector<1x128xf32> to vector<32x128xf32>
    %123 = arith.addf %120, %122 : vector<32x128xf32>
    %cst_50 = arith.constant 0.000000e+00 : f32
    %124 = vector.broadcast %cst_50 : f32 to vector<32x128xf32>
    %125 = arith.maximumf %123, %124 : vector<32x128xf32>
    %c0_51 = arith.constant 0 : index
    %c0_52 = arith.constant 0 : index
    %126 = vector.load %arg7[%c0_51, %c0_52] : memref<32x128xf32, #tpu.memory_space<vmem>>, vector<32x128xf32>
    tpu.vector_store %arg7[%c0_51, %c0_52], %125 {strides = array<i32>} : memref<32x128xf32, #tpu.memory_space<vmem>>, vector<32x128xf32>,
    return
  }
}

</mosaic_0001>

<llo_original>
// kernel: tpu_custom_call.1
$region0: #{tpu_custom_call.1}
  #allocation0 [shape = 'u32[]', space=smem, size = 0x4, offset = 0x4, fixed_abs, tag = 'smem constant byte address 0x4 - core index']
  #allocation1 [shape = 'u32[144,128]{1,0:T(1,128)}', space=vmem, size = 0x12000, scoped, tag = 'internal scratch']
  %s0 = inlined_call_operand.hbm [shape: f32[32,192], index: 0, kind: input, shape index: {}]
  %s1 = inlined_call_operand.hbm [shape: f32[192,128], index: 1, kind: input, shape index: {}]
  %s2 = inlined_call_operand.hbm [shape: f32[384,128], index: 2, kind: input, shape index: {}]
  %s3 = inlined_call_operand.vmem [shape: f32[1,128], index: 3, kind: input, shape index: {}]
  %s4 = inlined_call_operand.vmem [shape: f32[1,128], index: 4, kind: input, shape index: {}]
  %s5 = inlined_call_operand.vmem [shape: f32[1,128], index: 5, kind: input, shape index: {}]
  %s6 = inlined_call_operand.vmem [shape: f32[1,128], index: 6, kind: input, shape index: {}]
  %s7 = inlined_call_operand.hbm [shape: f32[32,128], index: 7, kind: output, shape index: {}]
  %s8 = sld [smem:[#allocation0]]
  $region50: #{tpu_custom_call.1} parent=0
    _
  %s10 = ssub.s32 1, %s8
  %s11 = scalar_select 0, %s10, %s8
  $region1: #{tpu_custom_call.1} parent=0
    #allocation2 [shape = 'u8[32768]{0}', space=vmem, size = 0x8000, scoped, tag = 'input window, operand 0, single buffered']
    #allocation3 [shape = 's32[1]{0}', space=sflag, size = 0x4, scoped, tag = 'scoped memory for tpu_custom_call.1']
    #allocation4 [shape = 's32[1]{0}', space=sflag, size = 0x4, scoped, tag = 'scoped memory for tpu_custom_call.1']
    #allocation5 [shape = 'u8[98304]{0}', space=vmem, size = 0x18000, scoped, tag = 'input window, operand 1, single buffered']
    #allocation6 [shape = 's32[1]{0}', space=sflag, size = 0x4, scoped, tag = 'scoped memory for tpu_custom_call.1']
    #allocation7 [shape = 'u8[196608]{0}', space=vmem, size = 0x30000, scoped, tag = 'input window, operand 2, single buffered']
    #allocation8 [shape = 'u8[16384]{0}', space=vmem, size = 0x4000, scoped, tag = 'output window, operand 0, single buffered']
    %12 = vsyncpa [#allocation3], 0
    %13 = vsyncpa [#allocation6], 0
    %14 = vsyncpa [#allocation4], 0
    // Predicated region
    $region2: #{tpu_custom_call.1} parent=1 // pred_check
      _
    $region3: #{tpu_custom_call.1} parent=1 // pred_check_branch
      %16 = sbr.rel (0) target = $region5
    $region4: #{tpu_custom_call.1} parent=1 // pred_region
      %s18 = ssub.s32 1024, 1024
      %19 = vsyncadd [#allocation3], %s18
      %s20 = sshll.u32 [#allocation2], 4
      %s21 = int_to_ptr.vmem [resolvable:$true] %s20
      %26 = dma.hbm_to_vmem [thread:$0]  %s0, 1024, %s21, [#allocation3], 256, 256, 16
    $region5: #{tpu_custom_call.1} parent=1 // pred_fallthru
      _
    // Predicated region
    $region6: #{tpu_custom_call.1} parent=1 // pred_check
      _
    $region7: #{tpu_custom_call.1} parent=1 // pred_check_branch
      %28 = sbr.rel (0) target = $region9
    $region8: #{tpu_custom_call.1} parent=1 // pred_region
      %s30 = ssub.s32 3072, 3072
      %31 = vsyncadd [#allocation6], %s30
      %s32 = sshll.u32 [#allocation5], 4
      %s33 = int_to_ptr.vmem [resolvable:$true] %s32
      %38 = dma.hbm_to_vmem [thread:$0]  %s1, 3072, %s33, [#allocation6], 128, 128, 8
    $region9: #{tpu_custom_call.1} parent=1 // pred_fallthru
      _
    // Predicated region
    $region10: #{tpu_custom_call.1} parent=1 // pred_check
      _
    $region11: #{tpu_custom_call.1} parent=1 // pred_check_branch
      %40 = sbr.rel (0) target = $region13
    $region12: #{tpu_custom_call.1} parent=1 // pred_region
      %s42 = ssub.s32 6144, 6144
      %43 = vsyncadd [#allocation6], %s42
      %s44 = sshll.u32 [#allocation7], 4
      %s45 = int_to_ptr.vmem [resolvable:$true] %s44
      %50 = dma.hbm_to_vmem [thread:$0]  %s2, 6144, %s45, [#allocation6], 128, 128, 8
    $region13: #{tpu_custom_call.1} parent=1 // pred_fallthru
      _
    // Predicated region
    $region14: #{tpu_custom_call.1} parent=1 // pred_check
      _
    $region15: #{tpu_custom_call.1} parent=1 // pred_check_branch
      %52 = sbr.rel (0) target = $region17
    $region16: #{tpu_custom_call.1} parent=1 // pred_region
      _
    $region17: #{tpu_custom_call.1} parent=1 // pred_fallthru
      _
    // Predicated region
    $region18: #{tpu_custom_call.1} parent=1 // pred_check
      _
    $region19: #{tpu_custom_call.1} parent=1 // pred_check_branch
      %54 = sbr.rel (0) target = $region21
    $region20: #{tpu_custom_call.1} parent=1 // pred_region
      _
    $region21: #{tpu_custom_call.1} parent=1 // pred_fallthru
      _
    // Predicated region
    $region22: #{tpu_custom_call.1} parent=1 // pred_check
      _
    $region23: #{tpu_custom_call.1} parent=1 // pred_check_branch
      %56 = sbr.rel (0) target = $region25
    $region24: #{tpu_custom_call.1} parent=1 // pred_region
      _
    $region25: #{tpu_custom_call.1} parent=1 // pred_fallthru
      _
    // Predicated region
    $region26: #{tpu_custom_call.1} parent=1 // pred_check
      _
    $region27: #{tpu_custom_call.1} parent=1 // pred_check_branch
      %58 = sbr.rel (0) target = $region29
    $region28: #{tpu_custom_call.1} parent=1 // pred_region
      _
    $region29: #{tpu_custom_call.1} parent=1 // pred_fallthru
      _
    // Predicated region
    $region30: #{tpu_custom_call.1} parent=1 // pred_check
      _
    $region31: #{tpu_custom_call.1} parent=1 // pred_check_branch
      %60 = sbr.rel (0) target = $region33
    $region32: #{tpu_custom_call.1} parent=1 // pred_region
      %61 = dma.done [#allocation3], 1024
    $region33: #{tpu_custom_call.1} parent=1 // pred_fallthru
      _
    // Predicated region
    $region34: #{tpu_custom_call.1} parent=1 // pred_check
      _
    $region35: #{tpu_custom_call.1} parent=1 // pred_check_branch
      %63 = sbr.rel (0) target = $region37
    $region36: #{tpu_custom_call.1} parent=1 // pred_region
      %64 = dma.done [#allocation6], 3072
    $region37: #{tpu_custom_call.1} parent=1 // pred_fallthru
      _
    // Predicated region
    $region38: #{tpu_custom_call.1} parent=1 // pred_check
      _
    $region39: #{tpu_custom_call.1} parent=1 // pred_check_branch
      %66 = sbr.rel (0) target = $region41
    $region40: #{tpu_custom_call.1} parent=1 // pred_region
      %67 = dma.done [#allocation6], 6144
    $region41: #{tpu_custom_call.1} parent=1 // pred_fallthru
      _
    %v68 = vld [vmem:[#allocation2] sm:$0xff]
    %v69 = vld [vmem:[#allocation2 + $0x8] sm:$0xff]
    %v70 = vld [vmem:[#allocation2 + $0x10] sm:$0xff]
    %v71 = vld [vmem:[#allocation2 + $0x18] sm:$0xff]
    %v72 = vld [vmem:[#allocation2 + $0x20] sm:$0xff]
    %v73 = vld [vmem:[#allocation2 + $0x28] sm:$0xff]
    %v74 = vld [vmem:[#allocation2 + $0x30] sm:$0xff]
    %v75 = vld [vmem:[#allocation2 + $0x38] sm:$0xff]
    %v76 = vld [vmem:[#allocation5] sm:$0xff]
    %v77 = vld [vmem:[#allocation5 + $0x8] sm:$0xff]
    %v78 = vld [vmem:[#allocation5 + $0x10] sm:$0xff]
    %v79 = vld [vmem:[#allocation5 + $0x18] sm:$0xff]
    %v80 = vld [vmem:[#allocation5 + $0x20] sm:$0xff]
    %v81 = vld [vmem:[#allocation5 + $0x28] sm:$0xff]
    %v82 = vld [vmem:[#allocation5 + $0x30] sm:$0xff]
    %v83 = vld [vmem:[#allocation5 + $0x38] sm:$0xff]
    %v84 = vld [vmem:[#allocation5 + $0x40] sm:$0xff]
    %v85 = vld [vmem:[#allocation5 + $0x48] sm:$0xff]
    %v86 = vld [vmem:[#allocation5 + $0x50] sm:$0xff]
    %v87 = vld [vmem:[#allocation5 + $0x58] sm:$0xff]
    %v88 = vld [vmem:[#allocation5 + $0x60] sm:$0xff]
    %v89 = vld [vmem:[#allocation5 + $0x68] sm:$0xff]
    %v90 = vld [vmem:[#allocation5 + $0x70] sm:$0xff]
    %v91 = vld [vmem:[#allocation5 + $0x78] sm:$0xff]
    %v92 = vld [vmem:[#allocation5 + $0x80] sm:$0xff]
    %v93 = vld [vmem:[#allocation5 + $0x88] sm:$0xff]
    %v94 = vld [vmem:[#allocation5 + $0x90] sm:$0xff]
    %v95 = vld [vmem:[#allocation5 + $0x98] sm:$0xff]
    %v96 = vld [vmem:[#allocation5 + $0xa0] sm:$0xff]
    %v97 = vld [vmem:[#allocation5 + $0xa8] sm:$0xff]
    %v98 = vld [vmem:[#allocation5 + $0xb0] sm:$0xff]
    %v99 = vld [vmem:[#allocation5 + $0xb8] sm:$0xff]
    %vm100 = vcmask 523264
    %v102 = vsel %vm100, %v69, 0
    %v105 = vsel %vm100, %v71, 0
    %v108 = vsel %vm100, %v73, 0
    %v111 = vsel %vm100, %v75, 0
    %113 = vmatprep.subr.mxu0 0.0
    %114 = vmatpush1.msra.mxu0 %v76
    %115 = vmatprep.subr.mxu0 0.0
    %116 = vmatpush1.msra.mxu0 %v77
    %117 = vmatprep.subr.mxu0 0.0
    %118 = vmatpush1.msra.mxu0 %v78
    %119 = vmatprep.subr.mxu0 0.0
    %120 = vmatpush1.msra.mxu0 %v79
    %121 = vmatprep.subr.mxu0 0.0
    %122 = vmatpush1.msra.mxu0 %v80
    %123 = vmatprep.subr.mxu0 0.0
    %124 = vmatpush1.msra.mxu0 %v81
    %125 = vmatprep.subr.mxu0 0.0
    %126 = vmatpush1.msra.mxu0 %v82
    %127 = vmatprep.subr.mxu0 0.0
    %128 = vmatpush1.msra.mxu0 %v83
    %129 = vmatprep.subr.mxu0 0.0
    %130 = vmatpush1.msra.mxu0 %v84
    %131 = vmatprep.subr.mxu0 0.0
    %132 = vmatpush1.msra.mxu0 %v85
    %133 = vmatprep.subr.mxu0 0.0
    %134 = vmatpush1.msra.mxu0 %v86
    %135 = vmatprep.subr.mxu0 0.0
    %136 = vmatpush1.msra.mxu0 %v87
    %137 = vmatprep.subr.mxu0 0.0
    %138 = vmatpush1.msra.mxu0 %v88
    %139 = vmatprep.subr.mxu0 0.0
    %140 = vmatpush1.msra.mxu0 %v89
    %141 = vmatprep.subr.mxu0 0.0
    %142 = vmatpush1.msra.mxu0 %v90
    %143 = vmatprep.subr.mxu0 0.0
    %144 = vmatpush1.msra.mxu0 %v91
    %145 = vmatprep.subr.mxu0 0.0
    %146 = vmatpush1.msra.mxu0 %v92
    %147 = vmatprep.subr.mxu0 0.0
    %148 = vmatpush1.msra.mxu0 %v93
    %149 = vmatprep.subr.mxu0 0.0
    %150 = vmatpush1.msra.mxu0 %v94
    %151 = vmatprep.subr.mxu0 0.0
    %152 = vmatpush1.msra.mxu0 %v95
    %153 = vmatprep.subr.mxu0 0.0
    %154 = vmatpush1.msra.mxu0 %v96
    %155 = vmatprep.subr.mxu0 0.0
    %156 = vmatpush1.msra.mxu0 %v97
    %157 = vmatprep.subr.mxu0 0.0
    %158 = vmatpush1.msra.mxu0 %v98
    %159 = vmatprep.subr.mxu0 0.0
    %160 = vmatpush1.msra.mxu0 %v99
    %161 = vmatprep.subr.mxu0 0.0
    %162 = vmatpush1.msra.mxu0 0.0
    %163 = vmatprep.subr.mxu0 0.0
    %164 = vmatpush1.msra.mxu0 0.0
    %165 = vmatprep.subr.mxu0 0.0
    %166 = vmatpush1.msra.mxu0 0.0
    %167 = vmatprep.subr.mxu0 0.0
    %168 = vmatpush1.msra.mxu0 0.0
    %169 = vmatprep.subr.mxu0 0.0
    %170 = vmatpush1.msra.mxu0 0.0
    %171 = vmatprep.subr.mxu0 0.0
    %172 = vmatpush1.msra.mxu0 0.0
    %173 = vmatprep.subr.mxu0 0.0
    %174 = vmatpush1.msra.mxu0 0.0
    %175 = vmatprep.subr.mxu0 0.0
    %176 = vmatpush1.msra.mxu0 0.0
    %177 = vmatprep.mubr.f32.mxu0 %v102
    %178 = vmatmul.mubr.f32.gmra.mrb[0].mxu0 %v68
    %v179 = vpop.f32.mrb[0].mxu0
    %v180 = vadd.f32 0.0, %v179
    %v181 = vpop.f32.mrb[0].mxu0
    %182 = vmatprep.mubr.f32.mxu0 %v105
    %183 = vmatmul.mubr.f32.gmra.mrb[0].mxu0 %v70
    %v184 = vpop.f32.mrb[0].mxu0
    %v185 = vadd.f32 0.0, %v184
    %v186 = vpop.f32.mrb[0].mxu0
    %187 = vmatprep.mubr.f32.mxu0 %v108
    %188 = vmatmul.mubr.f32.gmra.mrb[0].mxu0 %v72
    %v189 = vpop.f32.mrb[0].mxu0
    %v190 = vadd.f32 0.0, %v189
    %v191 = vpop.f32.mrb[0].mxu0
    %192 = vmatprep.mubr.f32.mxu0 %v111
    %193 = vmatmul.mubr.f32.gmra.mrb[0].mxu0 %v74
    %v194 = vpop.f32.mrb[0].mxu0
    %v195 = vadd.f32 0.0, %v194
    %v196 = vpop.f32.mrb[0].mxu0
    %197 = vdwg.mxu0
    %v198 = vadd.f32 %v180, %v185
    %v199 = vadd.f32 %v198, %v190
    %v200 = vadd.f32 %v199, %v195
    %v201 = vrot.slane %v200, 4
    %v202 = vadd.f32 %v200, %v201
    %v203 = vrot.slane %v202, 2
    %v204 = vadd.f32 %v202, %v203
    %v205 = vrot.slane %v204, 1
    %v206 = vadd.f32 %v204, %v205
    %207 = vrot.lane.b32.xlu0 %v206, 64
    %v208 = vpop.permute.xlu0 %207
    %v209 = vadd.f32 %v206, %v208
    %210 = vrot.lane.b32.xlu0 %v209, 32
    %v211 = vpop.permute.xlu0 %210
    %v212 = vadd.f32 %v209, %v211
    %213 = vrot.lane.b32.xlu0 %v212, 16
    %v214 = vpop.permute.xlu0 %213
    %v215 = vadd.f32 %v212, %v214
    %216 = vrot.lane.b32.xlu0 %v215, 8
    %v217 = vpop.permute.xlu0 %216
    %v218 = vadd.f32 %v215, %v217
    %v219 = vmul.f32 %v218, 0.001953125
    %v220 = vlaneseq
    %v221 = vshrl.u32 %v220, 7
    %v222 = vsub.s32 0, %v221
    %v223 = vrot.slane %v219, %v222
    %v224 = vsub.f32 %v180, %v223
    %v225 = vsub.f32 %v185, %v223
    %v226 = vsub.f32 %v190, %v223
    %v227 = vsub.f32 %v195, %v223
    %v228 = vmul.f32 %v224, %v224
    %v229 = vmul.f32 %v225, %v225
    %v230 = vmul.f32 %v226, %v226
    %v231 = vmul.f32 %v227, %v227
    %v232 = vadd.f32 %v228, %v229
    %v233 = vadd.f32 %v232, %v230
    %v234 = vadd.f32 %v233, %v231
    %v235 = vrot.slane %v234, 4
    %v236 = vadd.f32 %v234, %v235
    %v237 = vrot.slane %v236, 2
    %v238 = vadd.f32 %v236, %v237
    %v239 = vrot.slane %v238, 1
    %v240 = vadd.f32 %v238, %v239
    %241 = vrot.lane.b32.xlu0 %v240, 64
    %v242 = vpop.permute.xlu0 %241
    %v243 = vadd.f32 %v240, %v242
    %244 = vrot.lane.b32.xlu0 %v243, 32
    %v245 = vpop.permute.xlu0 %244
    %v246 = vadd.f32 %v243, %v245
    %247 = vrot.lane.b32.xlu0 %v246, 16
    %v248 = vpop.permute.xlu0 %247
    %v249 = vadd.f32 %v246, %v248
    %250 = vrot.lane.b32.xlu0 %v249, 8
    %v251 = vpop.permute.xlu0 %250
    %v252 = vadd.f32 %v249, %v251
    %v253 = vmul.f32 %v252, 0.001953125
    %v254 = vld [vmem:[%s3] sm:$0x1]
    %v255 = vadd.f32 %v253, 1e-05
    %v256 = vrsqrt.pop %v255
    %v257 = vmul.f32 %v254, %v256
    %v259 = vlaneseq
    %v260 = vshrl.u32 %v259, 7
    %v261 = vsub.s32 0, %v260
    %v262 = vrot.slane %v257, %v261
    %v264 = vmul.f32 %v224, %v262
    %v265 = vmul.f32 %v225, %v262
    %v266 = vmul.f32 %v226, %v262
    %v267 = vmul.f32 %v227, %v262
    %v268 = vld [vmem:[%s4] sm:$0x1]
    %v270 = vlaneseq
    %v271 = vshrl.u32 %v270, 7
    %v272 = vsub.s32 0, %v271
    %v273 = vrot.slane %v268, %v272
    %v275 = vadd.f32 %v264, %v273
    %v276 = vadd.f32 %v265, %v273
    %v277 = vadd.f32 %v266, %v273
    %v278 = vadd.f32 %v267, %v273
    %v279 = vmax.f32 %v275, 0.0
    %v280 = vmax.f32 %v276, 0.0
    %v281 = vmax.f32 %v277, 0.0
    %v282 = vmax.f32 %v278, 0.0
    %v283 = vlaneseq
    %v284 = vshrl.u32 %v283, 7
    %v285 = vadd.s32 %v284, 8
    %v286 = vadd.s32 %v284, 16
    %v287 = vadd.s32 %v284, 24
    %vm288 = vcmp.lt.s32.totalorder %v284, 0
    %v289 = vsub.s32 0, %v284
    %v290 = vsel %vm288, %v289, %v284
    %v291 = vshrl.u32 %v290, 4
    %v292 = vand.u32 %v290, 15
    %v293 = vsub.s32 0, %v292
    %v294 = vsel %vm288, %v293, %v292
    %vm295 = vcmp.lt.s32.totalorder %v285, 0
    %v296 = vsub.s32 0, %v285
    %v297 = vsel %vm295, %v296, %v285
    %v298 = vshrl.u32 %v297, 4
    %v299 = vand.u32 %v297, 15
    %v300 = vsub.s32 0, %v299
    %v301 = vsel %vm295, %v300, %v299
    %vm302 = vcmp.lt.s32.totalorder %v286, 0
    %v303 = vsub.s32 0, %v286
    %v304 = vsel %vm302, %v303, %v286
    %v305 = vshrl.u32 %v304, 4
    %v306 = vand.u32 %v304, 15
    %v307 = vsub.s32 0, %v306
    %v308 = vsel %vm302, %v307, %v306
    %vm309 = vcmp.lt.s32.totalorder %v287, 0
    %v310 = vsub.s32 0, %v287
    %v311 = vsel %vm309, %v310, %v287
    %v312 = vshrl.u32 %v311, 4
    %v313 = vand.u32 %v311, 15
    %v314 = vsub.s32 0, %v313
    %v315 = vsel %vm309, %v314, %v313
    %vm316 = vcmp.ne.s32.totalorder %v294, 0
    %vm317 = vcmp.ne.s32.totalorder %v301, 0
    %vm318 = vcmp.ne.s32.totalorder %v308, 0
    %vm319 = vcmp.ne.s32.totalorder %v315, 0
    %vm320 = vcmp.lt.s32.totalorder %v294, 0
    %vm321 = vcmp.lt.s32.totalorder %v301, 0
    %vm322 = vcmp.lt.s32.totalorder %v308, 0
    %vm323 = vcmp.lt.s32.totalorder %v315, 0
    %vm324 = vmand %vm320, %vm316
    %vm325 = vmand %vm321, %vm317
    %vm326 = vmand %vm322, %vm318
    %vm327 = vmand %vm323, %vm319
    %v328 = vadd.s32 %v294, 16
    %v329 = vadd.s32 %v301, 16
    %v330 = vadd.s32 %v308, 16
    %v331 = vadd.s32 %v315, 16
    %v332 = vsel %vm324, %v328, %v294
    %v333 = vsel %vm325, %v329, %v301
    %v334 = vsel %vm326, %v330, %v308
    %v335 = vsel %vm327, %v331, %v315
    %vm336 = vcmp.eq.s32.totalorder %v332, 0
    %vm337 = vcmp.eq.s32.totalorder %v333, 0
    %vm338 = vcmp.eq.s32.totalorder %v334, 0
    %vm339 = vcmp.eq.s32.totalorder %v335, 0
    %v340 = vrot.slane %v279, 7
    %v341 = vrot.slane %v280, 7
    %v342 = vrot.slane %v281, 7
    %v343 = vrot.slane %v282, 7
    %vm344 = vcmp.lt.s32.totalorder %v284, 1
    %v345 = vsel %vm344, %v342, %v343
    %v346 = vsel %vm344, %v341, %v342
    %v347 = vsel %vm344, %v340, %v341
    %v348 = vsel %vm344, %v343, %v340
    %v349 = vsel %vm336, 0.0, %v348
    %v350 = vsel %vm337, 0.0, %v347
    %v351 = vsel %vm338, 0.0, %v346
    %v352 = vsel %vm339, 0.0, %v345
    %vm353 = vcmp.eq.s32.totalorder %v332, 15
    %vm354 = vcmp.eq.s32.totalorder %v333, 15
    %vm355 = vcmp.eq.s32.totalorder %v334, 15
    %vm356 = vcmp.eq.s32.totalorder %v335, 15
    %v357 = vrot.slane %v279, 1
    %v358 = vrot.slane %v280, 1
    %v359 = vrot.slane %v281, 1
    %v360 = vrot.slane %v282, 1
    %vm361 = vcmp.lt.s32.totalorder %v284, 7
    %v362 = vsel %vm361, %v359, %v360
    %v363 = vsel %vm361, %v358, %v359
    %v364 = vsel %vm361, %v357, %v358
    %v365 = vsel %vm361, %v360, %v357
    %v366 = vsel %vm353, 0.0, %v364
    %v367 = vsel %vm354, 0.0, %v363
    %v368 = vsel %vm355, 0.0, %v362
    %v369 = vsel %vm356, 0.0, %v365
    %v370 = vld [vmem:[#allocation7] sm:$0xff]
    %v371 = vld [vmem:[#allocation7 + $0x8] sm:$0xff]
    %v372 = vld [vmem:[#allocation7 + $0x10] sm:$0xff]
    %v373 = vld [vmem:[#allocation7 + $0x18] sm:$0xff]
    %v374 = vld [vmem:[#allocation7 + $0x20] sm:$0xff]
    %v375 = vld [vmem:[#allocation7 + $0x28] sm:$0xff]
    %v376 = vld [vmem:[#allocation7 + $0x30] sm:$0xff]
    %v377 = vld [vmem:[#allocation7 + $0x38] sm:$0xff]
    %v378 = vld [vmem:[#allocation7 + $0x40] sm:$0xff]
    %v379 = vld [vmem:[#allocation7 + $0x48] sm:$0xff]
    %v380 = vld [vmem:[#allocation7 + $0x50] sm:$0xff]
    %v381 = vld [vmem:[#allocation7 + $0x58] sm:$0xff]
    %v382 = vld [vmem:[#allocation7 + $0x60] sm:$0xff]
    %v383 = vld [vmem:[#allocation7 + $0x68] sm:$0xff]
    %v384 = vld [vmem:[#allocation7 + $0x70] sm:$0xff]
    %v385 = vld [vmem:[#allocation7 + $0x78] sm:$0xff]
    %v386 = vld [vmem:[#allocation7 + $0x80] sm:$0xff]
    %v387 = vld [vmem:[#allocation7 + $0x88] sm:$0xff]
    %v388 = vld [vmem:[#allocation7 + $0x90] sm:$0xff]
    %v389 = vld [vmem:[#allocation7 + $0x98] sm:$0xff]
    %v390 = vld [vmem:[#allocation7 + $0xa0] sm:$0xff]
    %v391 = vld [vmem:[#allocation7 + $0xa8] sm:$0xff]
    %v392 = vld [vmem:[#allocation7 + $0xb0] sm:$0xff]
    %v393 = vld [vmem:[#allocation7 + $0xb8] sm:$0xff]
    %v394 = vld [vmem:[#allocation7 + $0xc0] sm:$0xff]
    %v395 = vld [vmem:[#allocation7 + $0xc8] sm:$0xff]
    %v396 = vld [vmem:[#allocation7 + $0xd0] sm:$0xff]
    %v397 = vld [vmem:[#allocation7 + $0xd8] sm:$0xff]
    %v398 = vld [vmem:[#allocation7 + $0xe0] sm:$0xff]
    %v399 = vld [vmem:[#allocation7 + $0xe8] sm:$0xff]
    %v400 = vld [vmem:[#allocation7 + $0xf0] sm:$0xff]
    %v401 = vld [vmem:[#allocation7 + $0xf8] sm:$0xff]
    %v402 = vld [vmem:[#allocation7 + $0x100] sm:$0xff]
    %v403 = vld [vmem:[#allocation7 + $0x108] sm:$0xff]
    %v404 = vld [vmem:[#allocation7 + $0x110] sm:$0xff]
    %v405 = vld [vmem:[#allocation7 + $0x118] sm:$0xff]
    %v406 = vld [vmem:[#allocation7 + $0x120] sm:$0xff]
    %v407 = vld [vmem:[#allocation7 + $0x128] sm:$0xff]
    %v408 = vld [vmem:[#allocation7 + $0x130] sm:$0xff]
    %v409 = vld [vmem:[#allocation7 + $0x138] sm:$0xff]
    %v410 = vld [vmem:[#allocation7 + $0x140] sm:$0xff]
    %v411 = vld [vmem:[#allocation7 + $0x148] sm:$0xff]
    %v412 = vld [vmem:[#allocation7 + $0x150] sm:$0xff]
    %v413 = vld [vmem:[#allocation7 + $0x158] sm:$0xff]
    %v414 = vld [vmem:[#allocation7 + $0x160] sm:$0xff]
    %v415 = vld [vmem:[#allocation7 + $0x168] sm:$0xff]
    %v416 = vld [vmem:[#allocation7 + $0x170] sm:$0xff]
    %v417 = vld [vmem:[#allocation7 + $0x178] sm:$0xff]
    %418 = vmatprep.subr.mxu0 0.0
    %419 = vmatpush1.msra.mxu0 %v370
    %420 = vmatprep.subr.mxu0 0.0
    %421 = vmatpush1.msra.mxu0 %v371
    %422 = vmatprep.subr.mxu0 0.0
    %423 = vmatpush1.msra.mxu0 %v372
    %424 = vmatprep.subr.mxu0 0.0
    %425 = vmatpush1.msra.mxu0 %v373
    %426 = vmatprep.subr.mxu0 0.0
    %427 = vmatpush1.msra.mxu0 %v374
    %428 = vmatprep.subr.mxu0 0.0
    %429 = vmatpush1.msra.mxu0 %v375
    %430 = vmatprep.subr.mxu0 0.0
    %431 = vmatpush1.msra.mxu0 %v376
    %432 = vmatprep.subr.mxu0 0.0
    %433 = vmatpush1.msra.mxu0 %v377
    %434 = vmatprep.subr.mxu0 0.0
    %435 = vmatpush1.msra.mxu0 %v378
    %436 = vmatprep.subr.mxu0 0.0
    %437 = vmatpush1.msra.mxu0 %v379
    %438 = vmatprep.subr.mxu0 0.0
    %439 = vmatpush1.msra.mxu0 %v380
    %440 = vmatprep.subr.mxu0 0.0
    %441 = vmatpush1.msra.mxu0 %v381
    %442 = vmatprep.subr.mxu0 0.0
    %443 = vmatpush1.msra.mxu0 %v382
    %444 = vmatprep.subr.mxu0 0.0
    %445 = vmatpush1.msra.mxu0 %v383
    %446 = vmatprep.subr.mxu0 0.0
    %447 = vmatpush1.msra.mxu0 %v384
    %448 = vmatprep.subr.mxu0 0.0
    %449 = vmatpush1.msra.mxu0 %v385
    %450 = vmatprep.subr.mxu0 0.0
    %451 = vmatpush1.msra.mxu0 %v386
    %452 = vmatprep.subr.mxu0 0.0
    %453 = vmatpush1.msra.mxu0 %v387
    %454 = vmatprep.subr.mxu0 0.0
    %455 = vmatpush1.msra.mxu0 %v388
    %456 = vmatprep.subr.mxu0 0.0
    %457 = vmatpush1.msra.mxu0 %v389
    %458 = vmatprep.subr.mxu0 0.0
    %459 = vmatpush1.msra.mxu0 %v390
    %460 = vmatprep.subr.mxu0 0.0
    %461 = vmatpush1.msra.mxu0 %v391
    %462 = vmatprep.subr.mxu0 0.0
    %463 = vmatpush1.msra.mxu0 %v392
    %464 = vmatprep.subr.mxu0 0.0
    %465 = vmatpush1.msra.mxu0 %v393
    %466 = vmatprep.subr.mxu0 0.0
    %467 = vmatpush1.msra.mxu0 %v394
    %468 = vmatprep.subr.mxu0 0.0
    %469 = vmatpush1.msra.mxu0 %v395
    %470 = vmatprep.subr.mxu0 0.0
    %471 = vmatpush1.msra.mxu0 %v396
    %472 = vmatprep.subr.mxu0 0.0
    %473 = vmatpush1.msra.mxu0 %v397
    %474 = vmatprep.subr.mxu0 0.0
    %475 = vmatpush1.msra.mxu0 %v398
    %476 = vmatprep.subr.mxu0 0.0
    %477 = vmatpush1.msra.mxu0 %v399
    %478 = vmatprep.subr.mxu0 0.0
    %479 = vmatpush1.msra.mxu0 %v400
    %480 = vmatprep.subr.mxu0 0.0
    %481 = vmatpush1.msra.mxu0 %v401
    %482 = vmatprep.mubr.f32.mxu0 %v279
    %483 = vmatmul.mubr.f32.gmra.mrb[0].mxu0 %v349
    %v484 = vpop.f32.mrb[0].mxu0
    %v485 = vadd.f32 0.0, %v484
    %v486 = vpop.f32.mrb[0].mxu0
    %487 = vmatprep.mubr.f32.mxu0 %v280
    %488 = vmatmul.mubr.f32.gmra.mrb[0].mxu0 %v350
    %v489 = vpop.f32.mrb[0].mxu0
    %v490 = vadd.f32 0.0, %v489
    %v491 = vpop.f32.mrb[0].mxu0
    %492 = vmatprep.mubr.f32.mxu0 %v281
    %493 = vmatmul.mubr.f32.gmra.mrb[0].mxu0 %v351
    %v494 = vpop.f32.mrb[0].mxu0
    %v495 = vadd.f32 0.0, %v494
    %v496 = vpop.f32.mrb[0].mxu0
    %497 = vmatprep.mubr.f32.mxu0 %v282
    %498 = vmatmul.mubr.f32.gmra.mrb[0].mxu0 %v352
    %v499 = vpop.f32.mrb[0].mxu0
    %v500 = vadd.f32 0.0, %v499
    %v501 = vpop.f32.mrb[0].mxu0
    %502 = vdwg.mxu0
    %503 = vmatprep.subr.mxu0 0.0
    %504 = vmatpush1.msra.mxu0 %v402
    %505 = vmatprep.subr.mxu0 0.0
    %506 = vmatpush1.msra.mxu0 %v403
    %507 = vmatprep.subr.mxu0 0.0
    %508 = vmatpush1.msra.mxu0 %v404
    %509 = vmatprep.subr.mxu0 0.0
    %510 = vmatpush1.msra.mxu0 %v405
    %511 = vmatprep.subr.mxu0 0.0
    %512 = vmatpush1.msra.mxu0 %v406
    %513 = vmatprep.subr.mxu0 0.0
    %514 = vmatpush1.msra.mxu0 %v407
    %515 = vmatprep.subr.mxu0 0.0
    %516 = vmatpush1.msra.mxu0 %v408
    %517 = vmatprep.subr.mxu0 0.0
    %518 = vmatpush1.msra.mxu0 %v409
    %519 = vmatprep.subr.mxu0 0.0
    %520 = vmatpush1.msra.mxu0 %v410
    %521 = vmatprep.subr.mxu0 0.0
    %522 = vmatpush1.msra.mxu0 %v411
    %523 = vmatprep.subr.mxu0 0.0
    %524 = vmatpush1.msra.mxu0 %v412
    %525 = vmatprep.subr.mxu0 0.0
    %526 = vmatpush1.msra.mxu0 %v413
    %527 = vmatprep.subr.mxu0 0.0
    %528 = vmatpush1.msra.mxu0 %v414
    %529 = vmatprep.subr.mxu0 0.0
    %530 = vmatpush1.msra.mxu0 %v415
    %531 = vmatprep.subr.mxu0 0.0
    %532 = vmatpush1.msra.mxu0 %v416
    %533 = vmatprep.subr.mxu0 0.0
    %534 = vmatpush1.msra.mxu0 %v417
    %535 = vmatprep.subr.mxu0 0.0
    %536 = vmatpush1.msra.mxu0 0.0
    %537 = vmatprep.subr.mxu0 0.0
    %538 = vmatpush1.msra.mxu0 0.0
    %539 = vmatprep.subr.mxu0 0.0
    %540 = vmatpush1.msra.mxu0 0.0
    %541 = vmatprep.subr.mxu0 0.0
    %542 = vmatpush1.msra.mxu0 0.0
    %543 = vmatprep.subr.mxu0 0.0
    %544 = vmatpush1.msra.mxu0 0.0
    %545 = vmatprep.subr.mxu0 0.0
    %546 = vmatpush1.msra.mxu0 0.0
    %547 = vmatprep.subr.mxu0 0.0
    %548 = vmatpush1.msra.mxu0 0.0
    %549 = vmatprep.subr.mxu0 0.0
    %550 = vmatpush1.msra.mxu0 0.0
    %551 = vmatprep.subr.mxu0 0.0
    %552 = vmatpush1.msra.mxu0 0.0
    %553 = vmatprep.subr.mxu0 0.0
    %554 = vmatpush1.msra.mxu0 0.0
    %555 = vmatprep.subr.mxu0 0.0
    %556 = vmatpush1.msra.mxu0 0.0
    %557 = vmatprep.subr.mxu0 0.0
    %558 = vmatpush1.msra.mxu0 0.0
    %559 = vmatprep.subr.mxu0 0.0
    %560 = vmatpush1.msra.mxu0 0.0
    %561 = vmatprep.subr.mxu0 0.0
    %562 = vmatpush1.msra.mxu0 0.0
    %563 = vmatprep.subr.mxu0 0.0
    %564 = vmatpush1.msra.mxu0 0.0
    %565 = vmatprep.subr.mxu0 0.0
    %566 = vmatpush1.msra.mxu0 0.0
    %567 = vmatprep.mubr.f32.mxu0 0.0
    %568 = vmatmul.mubr.f32.gmra.mrb[0].mxu0 %v366
    %v569 = vpop.f32.mrb[0].mxu0
    %v570 = vadd.f32 %v485, %v569
    %v571 = vpop.f32.mrb[0].mxu0
    %572 = vmatprep.mubr.f32.mxu0 0.0
    %573 = vmatmul.mubr.f32.gmra.mrb[0].mxu0 %v367
    %v574 = vpop.f32.mrb[0].mxu0
    %v575 = vadd.f32 %v490, %v574
    %v576 = vpop.f32.mrb[0].mxu0
    %577 = vmatprep.mubr.f32.mxu0 0.0
    %578 = vmatmul.mubr.f32.gmra.mrb[0].mxu0 %v368
    %v579 = vpop.f32.mrb[0].mxu0
    %v580 = vadd.f32 %v495, %v579
    %v581 = vpop.f32.mrb[0].mxu0
    %582 = vmatprep.mubr.f32.mxu0 0.0
    %583 = vmatmul.mubr.f32.gmra.mrb[0].mxu0 %v369
    %v584 = vpop.f32.mrb[0].mxu0
    %v585 = vadd.f32 %v500, %v584
    %v586 = vpop.f32.mrb[0].mxu0
    %587 = vdwg.mxu0
    %v588 = vadd.f32 %v570, %v575
    %v589 = vadd.f32 %v588, %v580
    %v590 = vadd.f32 %v589, %v585
    %v591 = vrot.slane %v590, 4
    %v592 = vadd.f32 %v590, %v591
    %v593 = vrot.slane %v592, 2
    %v594 = vadd.f32 %v592, %v593
    %v595 = vrot.slane %v594, 1
    %v596 = vadd.f32 %v594, %v595
    %597 = vrot.lane.b32.xlu0 %v596, 64
    %v598 = vpop.permute.xlu0 %597
    %v599 = vadd.f32 %v596, %v598
    %600 = vrot.lane.b32.xlu0 %v599, 32
    %v601 = vpop.permute.xlu0 %600
    %v602 = vadd.f32 %v599, %v601
    %603 = vrot.lane.b32.xlu0 %v602, 16
    %v604 = vpop.permute.xlu0 %603
    %v605 = vadd.f32 %v602, %v604
    %606 = vrot.lane.b32.xlu0 %v605, 8
    %v607 = vpop.permute.xlu0 %606
    %v608 = vadd.f32 %v605, %v607
    %v609 = vmul.f32 %v608, 0.001953125
    %v610 = vlaneseq
    %v611 = vshrl.u32 %v610, 7
    %v612 = vsub.s32 0, %v611
    %v613 = vrot.slane %v609, %v612
    %v614 = vsub.f32 %v570, %v613
    %v615 = vsub.f32 %v575, %v613
    %v616 = vsub.f32 %v580, %v613
    %v617 = vsub.f32 %v585, %v613
    %v618 = vmul.f32 %v614, %v614
    %v619 = vmul.f32 %v615, %v615
    %v620 = vmul.f32 %v616, %v616
    %v621 = vmul.f32 %v617, %v617
    %v622 = vadd.f32 %v618, %v619
    %v623 = vadd.f32 %v622, %v620
    %v624 = vadd.f32 %v623, %v621
    %v625 = vrot.slane %v624, 4
    %v626 = vadd.f32 %v624, %v625
    %v627 = vrot.slane %v626, 2
    %v628 = vadd.f32 %v626, %v627
    %v629 = vrot.slane %v628, 1
    %v630 = vadd.f32 %v628, %v629
    %631 = vrot.lane.b32.xlu0 %v630, 64
    %v632 = vpop.permute.xlu0 %631
    %v633 = vadd.f32 %v630, %v632
    %634 = vrot.lane.b32.xlu0 %v633, 32
    %v635 = vpop.permute.xlu0 %634
    %v636 = vadd.f32 %v633, %v635
    %637 = vrot.lane.b32.xlu0 %v636, 16
    %v638 = vpop.permute.xlu0 %637
    %v639 = vadd.f32 %v636, %v638
    %640 = vrot.lane.b32.xlu0 %v639, 8
    %v641 = vpop.permute.xlu0 %640
    %v642 = vadd.f32 %v639, %v641
    %v643 = vmul.f32 %v642, 0.001953125
    %v644 = vld [vmem:[%s5] sm:$0x1]
    %v645 = vadd.f32 %v643, 1e-05
    %v646 = vrsqrt.pop %v645
    %v647 = vmul.f32 %v644, %v646
    %v649 = vlaneseq
    %v650 = vshrl.u32 %v649, 7
    %v651 = vsub.s32 0, %v650
    %v652 = vrot.slane %v647, %v651
    %v654 = vmul.f32 %v614, %v652
    %v655 = vmul.f32 %v615, %v652
    %v656 = vmul.f32 %v616, %v652
    %v657 = vmul.f32 %v617, %v652
    %v658 = vld [vmem:[%s6] sm:$0x1]
    %v660 = vlaneseq
    %v661 = vshrl.u32 %v660, 7
    %v662 = vsub.s32 0, %v661
    %v663 = vrot.slane %v658, %v662
    %v665 = vadd.f32 %v654, %v663
    %v666 = vadd.f32 %v655, %v663
    %v667 = vadd.f32 %v656, %v663
    %v668 = vadd.f32 %v657, %v663
    %v669 = vmax.f32 %v665, 0.0
    %v670 = vmax.f32 %v666, 0.0
    %v671 = vmax.f32 %v667, 0.0
    %v672 = vmax.f32 %v668, 0.0
    %673 = vst [vmem:[#allocation8] sm:$0xff] %v669
    %674 = vst [vmem:[#allocation8 + $0x8] sm:$0xff] %v670
    %675 = vst [vmem:[#allocation8 + $0x10] sm:$0xff] %v671
    %676 = vst [vmem:[#allocation8 + $0x18] sm:$0xff] %v672
    // Predicated region
    $region42: #{tpu_custom_call.1} parent=1 // pred_check
      _
    $region43: #{tpu_custom_call.1} parent=1 // pred_check_branch
      %678 = sbr.rel (0) target = $region45
    $region44: #{tpu_custom_call.1} parent=1 // pred_region
      %s680 = ssub.s32 512, 512
      %681 = vsyncadd [#allocation4], %s680
      %s682 = sshll.u32 [#allocation8], 4
      %s683 = int_to_ptr.vmem [resolvable:$true] %s682
      %688 = dma.vmem_to_hbm [thread:$0]  %s683, 512, %s7, [#allocation4], 128, 128, 8
    $region45: #{tpu_custom_call.1} parent=1 // pred_fallthru
      _
    // Predicated region
    $region46: #{tpu_custom_call.1} parent=1 // pred_check
      _
    $region47: #{tpu_custom_call.1} parent=1 // pred_check_branch
      %690 = sbr.rel (0) target = $region49
    $region48: #{tpu_custom_call.1} parent=1 // pred_region
      %691 = dma.done [#allocation4], 512
    $region49: #{tpu_custom_call.1} parent=1 // pred_fallthru
      _
    %692 = vsyncpa [#allocation3], 1
    %693 = vsyncpa [#allocation6], 1
    %694 = vsyncpa [#allocation4], 1

</llo_original>
